<compile_context>
chip_gen: v5e
topology: v5e:2x2
jax: 0.10.0
libtpu: 0.0.40
codegen_flags: <defaults>
</compile_context>

<pallas_src>
import jax
import jax.numpy as jnp
from jax.experimental import pallas as pl
from jax.experimental.pallas import tpu as pltpu


def mlp_kernel(x_ref, w1_ref, b1_ref, w2_ref, b2_ref, w3t_ref, b3_ref, o_ref):
    x = x_ref[...]
    # Layer 1: Linear(input_dim -> 64) + ReLU   (Dropout(0.3): identity in eval)
    h1 = jnp.dot(x, w1_ref[...], preferred_element_type=jnp.float32) + b1_ref[...]
    h1 = jnp.maximum(h1, 0.0)
    # Layer 2: Linear(64 -> 32) + ReLU          (Dropout(0.3): identity in eval)
    # Cast the activation to the weight dtype so a bf16 weight gives a native
    # bf16 x bf16 MXU pass (no promotion back to an f32 multi-pass matmul).
    h2 = jnp.dot(h1.astype(w2_ref.dtype), w2_ref[...],
                 preferred_element_type=jnp.float32) + b2_ref[...]
    h2 = jnp.maximum(h2, 0.0)
    # Layer 3: Linear(32 -> 1) + Sigmoid.  An N=1 MXU matmul wastes 255/256
    # columns yet still costs one vmatmul push per 8 rows, so compute it on
    # the otherwise-idle VPU/XLU: broadcast multiply + lane reduction (f32).
    z = jnp.sum(h2 * w3t_ref[...].astype(jnp.float32), axis=-1, keepdims=True)
    z = z + b3_ref[...]
    o_ref[...] = jax.nn.sigmoid(z).astype(o_ref.dtype)
    # TODO(synk): training-mode Dropout(0.3) would need a pltpu.prng_seed /
    # pltpu.prng_random_bits mask path; this forward matches eval-mode semantics.


def _round_up(n, m):
    return ((n + m - 1) // m) * m


def net_forward(x, params, *, bm=4096):
    """Fused forward pass.  x: [B, input_dim]; params = (w1,b1,w2,b2,w3,b3)."""
    B, d_in = x.shape
    w1, b1, w2, b2, w3, b3 = params
    h1d = w1.shape[1]
    h2d = w2.shape[1]
    d_out = w3.shape[1]
    assert d_out == 1
    # Present the (32,1) layer-3 weight as a (1,32) row so the kernel can do a
    # lane reduction instead of an N=1 MXU matmul (no in-kernel transpose).
    w3t = w3.reshape(1, h2d)

    # Row tile: multiple of 8 (sublane constraint), capped at the padded batch.
    # bm=4096 amortizes the ~0.5us/step overhead to <3% while the lane-padded
    # x tile + (bm,1) output tile + h1/h2 temps stay ~12 MiB (fits v7x VMEM).
    Bp8 = _round_up(max(B, 8), 8)
    bm = max(8, min(_round_up(bm, 8), Bp8))
    # v7x megacore: keep >= 2 "parallel" grid steps whenever the batch allows
    # so both TensorCores get work (harmless on single-TC v5e/v6e).
    if Bp8 >= 16:
        bm = min(bm, _round_up(pl.cdiv(Bp8, 2), 8))
    Bp = _round_up(B, bm)
    if Bp != B:
        # Zero-pad tail rows; rows are independent, padded rows sliced off below.
        x = jnp.pad(x, ((0, Bp - B), (0, 0)))
    grid = (Bp // bm,)

    out_dtype = x.dtype
    cost = pl.CostEstimate(
        flops=2 * Bp * (d_in * h1d + h1d * h2d + h2d * d_out),
        transcendentals=Bp * d_out,
        bytes_accessed=(
            Bp * d_in * x.dtype.itemsize
            + sum(int(p.size) * p.dtype.itemsize for p in (w1, b1, w2, b2, w3t, b3))
            + Bp * d_out * jnp.dtype(out_dtype).itemsize
        ),
    )

    out = pl.pallas_call(
        mlp_kernel,
        out_shape=jax.ShapeDtypeStruct((Bp, d_out), out_dtype),
        grid_spec=pltpu.PrefetchScalarGridSpec(
            num_scalar_prefetch=0,
            grid=grid,
            in_specs=[
                # x: one row tile per grid step (double-buffered -> the DMA of
                # step i+1 overlaps the matmuls of step i).
                pl.BlockSpec((bm, d_in), lambda i: (i, 0)),
                # Weights/biases: constant index_map -> fetched once, resident
                # in VMEM across all steps (tiny; default double-buffer is noise).
                pl.BlockSpec((d_in, h1d), lambda i: (0, 0)),
                pl.BlockSpec((1, h1d), lambda i: (0, 0)),
                pl.BlockSpec((h1d, h2d), lambda i: (0, 0)),
                pl.BlockSpec((1, h2d), lambda i: (0, 0)),
                pl.BlockSpec((1, h2d), lambda i: (0, 0)),     # w3 as (1, 32) row
                pl.BlockSpec((1, d_out), lambda i: (0, 0)),
            ],
            out_specs=pl.BlockSpec((bm, d_out), lambda i: (i, 0)),
        ),
        compiler_params=pltpu.CompilerParams(
            dimension_semantics=("parallel",),
            # Headroom for bm up to ~8192 while staying under v7x's 64 MiB
            # physical VMEM; default bm=4096 uses ~12 MiB.
            vmem_limit_bytes=48 * 1024 * 1024,
        ),
        cost_estimate=cost,
    )(x, w1, b1, w2, b2, w3t, b3)
    return out[:B]


def init_params(key, input_dim, dtype=jnp.bfloat16):
    """Deterministic init matching nn.Linear shapes (weights stored (in, out)).

    Weights in `dtype` (bf16 = MXU-native operands), biases kept f32 (they only
    feed the f32 elementwise path)."""
    k = jax.random.split(key, 6)

    def linear(kw, kb, fan_in, fan_out):
        bound = 1.0 / jnp.sqrt(fan_in)
        w = jax.random.uniform(kw, (fan_in, fan_out), jnp.float32, -bound, bound)
        b = jax.random.uniform(kb, (1, fan_out), jnp.float32, -bound, bound)
        return w.astype(dtype), b

    w1, b1 = linear(k[0], k[1], input_dim, 64)
    w2, b2 = linear(k[2], k[3], 64, 32)
    w3, b3 = linear(k[4], k[5], 32, 1)
    return (w1, b1, w2, b2, w3, b3)


def net_forward_ref(x, params):
    w1, b1, w2, b2, w3, b3 = params
    f32 = jnp.float32
    h1 = jnp.maximum(x.astype(f32) @ w1.astype(f32) + b1.astype(f32), 0.0)
    h2 = jnp.maximum(h1 @ w2.astype(f32) + b2.astype(f32), 0.0)
    return jax.nn.sigmoid(h2 @ w3.astype(f32) + b3.astype(f32))


if __name__ == "__main__":
    key = jax.random.PRNGKey(0)
    kx, kp = jax.random.split(key)

    # B deliberately NOT a multiple of the tile -> exercises the padded tail.
    B, input_dim = 20, 32

    # bf16 produced upstream (not cast inside the wrapper): MXU-native operands.
    x_bf16 = jax.random.normal(kx, (B, input_dim), jnp.float32).astype(jnp.bfloat16)
    params_bf16 = init_params(kp, input_dim, dtype=jnp.bfloat16)
    ref_bf16 = net_forward_ref(x_bf16, params_bf16)

    out_default = jax.block_until_ready(net_forward(x_bf16, params_bf16))        # 2-step grid
    out_tiled = jax.block_until_ready(net_forward(x_bf16, params_bf16, bm=8))    # 3-step grid

    assert out_default.shape == (B, 1) and out_default.dtype == jnp.bfloat16
    assert out_tiled.shape == (B, 1)
    assert jnp.allclose(out_default.astype(jnp.float32), ref_bf16, atol=3e-2, rtol=3e-2)
    assert jnp.allclose(out_tiled.astype(jnp.float32), ref_bf16, atol=3e-2, rtol=3e-2)

    # f32 path through the same kernel: tight check of the fused structure.
    x_f32 = jax.random.normal(kx, (B, input_dim), jnp.float32)
    params_f32 = init_params(kp, input_dim, dtype=jnp.float32)
    ref_f32 = net_forward_ref(x_f32, params_f32)
    out_f32 = jax.block_until_ready(net_forward(x_f32, params_f32))
    assert jnp.allclose(out_f32, ref_f32, atol=1e-4, rtol=1e-4)

    print("KERNEL_OK")
</pallas_src>

<mosaic_0001>
module attributes {stable_mosaic.version = 11 : i64} {
  func.func @mlp_kernel(%arg0: i32, %arg1: memref<16x32xbf16, #tpu.memory_space<vmem>>, %arg2: memref<32x64xbf16, #tpu.memory_space<vmem>>, %arg3: memref<1x64xf32, #tpu.memory_space<vmem>>, %arg4: memref<64x32xbf16, #tpu.memory_space<vmem>>, %arg5: memref<1x32xf32, #tpu.memory_space<vmem>>, %arg6: memref<1x32xbf16, #tpu.memory_space<vmem>>, %arg7: memref<1x1xf32, #tpu.memory_space<vmem>>, %arg8: memref<16x1xbf16, #tpu.memory_space<vmem>>) attributes {dimension_semantics = [#tpu.dimension_semantics<parallel>], iteration_bounds = array<i64: 2>, scalar_prefetch = 0 : i64, scratch_operands = 0 : i64, tpu.core_type = #tpu.core_type<tc>, window_params = [{transform_indices = @transform_0, window_bounds = array<i64: 16, 32>}, {pipeline_mode = #tpu.pipeline_mode<synchronous>, transform_indices = @transform_1, window_bounds = array<i64: 32, 64>}, {pipeline_mode = #tpu.pipeline_mode<synchronous>, transform_indices = @transform_2, window_bounds = array<i64: 1, 64>}, {pipeline_mode = #tpu.pipeline_mode<synchronous>, transform_indices = @transform_3, window_bounds = array<i64: 64, 32>}, {pipeline_mode = #tpu.pipeline_mode<synchronous>, transform_indices = @transform_4, window_bounds = array<i64: 1, 32>}, {pipeline_mode = #tpu.pipeline_mode<synchronous>, transform_indices = @transform_5, window_bounds = array<i64: 1, 32>}, {pipeline_mode = #tpu.pipeline_mode<synchronous>, transform_indices = @transform_6, window_bounds = array<i64: 1, 1>}, {transform_indices = @transform_7, window_bounds = array<i64: 16, 1>}]} {
    %c0 = arith.constant 0 : index
    %c0_0 = arith.constant 0 : index
    %0 = vector.load %arg1[%c0, %c0_0] : memref<16x32xbf16, #tpu.memory_space<vmem>>, vector<16x32xbf16>
    %c0_1 = arith.constant 0 : index
    %c0_2 = arith.constant 0 : index
    %1 = vector.load %arg2[%c0_1, %c0_2] : memref<32x64xbf16, #tpu.memory_space<vmem>>, vector<32x64xbf16>
    %cst = arith.constant dense<0.000000e+00> : vector<16x64xf32>
    %2 = tpu.matmul %0, %1, %cst {dimension_numbers = #tpu.dot_dimension_numbers<[1], [0], [0], [1], [0, 0, 1, 1], [], []>} : vector<16x32xbf16>, vector<32x64xbf16>, vector<16x64xf32> -> vector<16x64xf32>
    %c0_3 = arith.constant 0 : index
    %c0_4 = arith.constant 0 : index
    %3 = vector.load %arg3[%c0_3, %c0_4] : memref<1x64xf32, #tpu.memory_space<vmem>>, vector<1x64xf32>
    %4 = vector.broadcast %3 : vector<1x64xf32> to vector<16x64xf32>
    %5 = arith.addf %2, %4 : vector<16x64xf32>
    %cst_5 = arith.constant 0.000000e+00 : f32
    %6 = vector.broadcast %cst_5 : f32 to vector<16x64xf32>
    %7 = arith.maximumf %5, %6 : vector<16x64xf32>
    %8 = arith.truncf %7 : vector<16x64xf32> to vector<16x64xbf16>
    %c0_6 = arith.constant 0 : index
    %c0_7 = arith.constant 0 : index
    %9 = vector.load %arg4[%c0_6, %c0_7] : memref<64x32xbf16, #tpu.memory_space<vmem>>, vector<64x32xbf16>
    %cst_8 = arith.constant dense<0.000000e+00> : vector<16x32xf32>
    %10 = tpu.matmul %8, %9, %cst_8 {dimension_numbers = #tpu.dot_dimension_numbers<[1], [0], [0], [1], [0, 0, 1, 1], [], []>} : vector<16x64xbf16>, vector<64x32xbf16>, vector<16x32xf32> -> vector<16x32xf32>
    %c0_9 = arith.constant 0 : index
    %c0_10 = arith.constant 0 : index
    %11 = vector.load %arg5[%c0_9, %c0_10] : memref<1x32xf32, #tpu.memory_space<vmem>>, vector<1x32xf32>
    %12 = vector.broadcast %11 : vector<1x32xf32> to vector<16x32xf32>
    %13 = arith.addf %10, %12 : vector<16x32xf32>
    %cst_11 = arith.constant 0.000000e+00 : f32
    %14 = vector.broadcast %cst_11 : f32 to vector<16x32xf32>
    %15 = arith.maximumf %13, %14 : vector<16x32xf32>
    %c0_12 = arith.constant 0 : index
    %c0_13 = arith.constant 0 : index
    %16 = vector.load %arg6[%c0_12, %c0_13] : memref<1x32xbf16, #tpu.memory_space<vmem>>, vector<1x32xbf16>
    %17 = arith.extf %16 : vector<1x32xbf16> to vector<1x32xf32>
    %18 = vector.broadcast %17 : vector<1x32xf32> to vector<16x32xf32>
    %19 = arith.mulf %15, %18 : vector<16x32xf32>
    %cst_14 = arith.constant dense<0.000000e+00> : vector<16xf32>
    %20 = vector.multi_reduction <add>, %19, %cst_14 [1] : vector<16x32xf32> to vector<16xf32>
    %21 = vector.shape_cast %20 : vector<16xf32> to vector<16x1xf32>
    %c0_15 = arith.constant 0 : index
    %c0_16 = arith.constant 0 : index
    %22 = vector.load %arg7[%c0_15, %c0_16] : memref<1x1xf32, #tpu.memory_space<vmem>>, vector<1x1xf32>
    %23 = vector.broadcast %22 : vector<1x1xf32> to vector<16x1xf32>
    %24 = arith.addf %21, %23 : vector<16x1xf32>
    %25 = arith.negf %24 : vector<16x1xf32>
    %26 = math.exp %25 : vector<16x1xf32>
    %cst_17 = arith.constant 1.000000e+00 : f32
    %27 = vector.broadcast %cst_17 : f32 to vector<16x1xf32>
    %28 = arith.addf %27, %26 : vector<16x1xf32>
    %29 = arith.divf %27, %28 : vector<16x1xf32>
    %30 = arith.truncf %29 : vector<16x1xf32> to vector<16x1xbf16>
    %c0_18 = arith.constant 0 : index
    %c0_19 = arith.constant 0 : index
    %31 = vector.load %arg8[%c0_18, %c0_19] : memref<16x1xbf16, #tpu.memory_space<vmem>>, vector<16x1xbf16>
    tpu.vector_store %arg8[%c0_18, %c0_19], %30 {strides = array<i32>} : memref<16x1xbf16, #tpu.memory_space<vmem>>, vector<16x1xbf16>,
    return
  }
  func.func @transform_0(%arg0: i32) -> (i32, i32) {
    %c0_i32 = arith.constant 0 : i32
    %c0_i32_0 = arith.constant 0 : i32
    return %arg0, %c0_i32 : i32, i32
  }
  func.func @transform_1(%arg0: i32) -> (i32, i32) {
    %c0_i32 = arith.constant 0 : i32
    %c0_i32_0 = arith.constant 0 : i32
    %c0_i32_1 = arith.constant 0 : i32
    return %c0_i32, %c0_i32_0 : i32, i32
  }
  func.func @transform_2(%arg0: i32) -> (i32, i32) {
    %c0_i32 = arith.constant 0 : i32
    %c0_i32_0 = arith.constant 0 : i32
    %c0_i32_1 = arith.constant 0 : i32
    return %c0_i32, %c0_i32_0 : i32, i32
  }
  func.func @transform_3(%arg0: i32) -> (i32, i32) {
    %c0_i32 = arith.constant 0 : i32
    %c0_i32_0 = arith.constant 0 : i32
    %c0_i32_1 = arith.constant 0 : i32
    return %c0_i32, %c0_i32_0 : i32, i32
  }
  func.func @transform_4(%arg0: i32) -> (i32, i32) {
    %c0_i32 = arith.constant 0 : i32
    %c0_i32_0 = arith.constant 0 : i32
    %c0_i32_1 = arith.constant 0 : i32
    return %c0_i32, %c0_i32_0 : i32, i32
  }
  func.func @transform_5(%arg0: i32) -> (i32, i32) {
    %c0_i32 = arith.constant 0 : i32
    %c0_i32_0 = arith.constant 0 : i32
    %c0_i32_1 = arith.constant 0 : i32
    return %c0_i32, %c0_i32_0 : i32, i32
  }
  func.func @transform_6(%arg0: i32) -> (i32, i32) {
    %c0_i32 = arith.constant 0 : i32
    %c0_i32_0 = arith.constant 0 : i32
    %c0_i32_1 = arith.constant 0 : i32
    return %c0_i32, %c0_i32_0 : i32, i32
  }
  func.func @transform_7(%arg0: i32) -> (i32, i32) {
    %c0_i32 = arith.constant 0 : i32
    %c0_i32_0 = arith.constant 0 : i32
    return %arg0, %c0_i32 : i32, i32
  }
}

</mosaic_0001>

<llo_original>
// kernel: tpu_custom_call.1
$region0: #{tpu_custom_call.1}
  #allocation0 [shape = 'u32[]', space=smem, size = 0x4, offset = 0x4, fixed_abs, tag = 'smem constant byte address 0x4 - core index']
  #allocation1 [shape = 'u32[72,128]{1,0:T(1,128)}', space=vmem, size = 0x9000, scoped, tag = 'internal scratch']
  #allocation2 [shape = 'f32[1,1]{1,0:T(1,128)S(1)}', space=vmem, size = 0x200, scoped, tag = 'scoped memory for tpu_custom_call.1']
  %s0 = inlined_call_operand.vmem [shape: bf16[32,32], index: 0, kind: input, shape index: {}]
  %s1 = inlined_call_operand.vmem [shape: bf16[32,64], index: 1, kind: input, shape index: {}]
  %s2 = inlined_call_operand.vmem [shape: f32[1,64], index: 2, kind: input, shape index: {}]
  %s3 = inlined_call_operand.vmem [shape: bf16[64,32], index: 3, kind: input, shape index: {}]
  %s4 = inlined_call_operand.vmem [shape: f32[1,32], index: 4, kind: input, shape index: {}]
  %s5 = inlined_call_operand.vmem [shape: bf16[1,32], index: 5, kind: input, shape index: {}]
  %s6 = inlined_call_operand.<no memory space> [shape: f32[1,1], index: 6, kind: input, shape index: {}]
  %s7 = inlined_call_operand.vmem [shape: bf16[32,1], index: 7, kind: output, shape index: {}]
  %s8 = sld [smem:[#allocation0]]
  $region61: #{tpu_custom_call.1} parent=0
    _
  %s10 = ssub.s32 1, %s8
  %s11 = scalar_select 0, %s10, %s8
  %v12 = vstv %s6
  %13 = vst [vmem:[#allocation2] sm:$0x1] %v12
  loop: start=0, step=1, limit=4
  $region2: #{tpu_custom_call.1} parent=0 // loop_pre_header
    _
  $region3: #{tpu_custom_call.1} parent=0 // loop_header
    %s15 = sphi 0, %s19
    %p16 = scmp.ge.s32.totalorder %s15, 4
    %s25 = sphi 0, %s27
    %s28 = sphi 0, %s25
    %s29 = sphi 0, %s28
    %s45 = sphi 0, %s29
    %s49 = sphi 0, %s49
    %s51 = sphi 0, %s49
    %s52 = sphi 0, %s51
    %s66 = sphi 0, %s52
    %s70 = sphi 0, %s70
    %s72 = sphi 0, %s70
    %s73 = sphi 0, %s72
    %s87 = sphi 0, %s73
    %s91 = sphi 0, %s91
    %s93 = sphi 0, %s91
    %s94 = sphi 0, %s93
    %s108 = sphi 0, %s94
    %s112 = sphi 0, %s112
    %s114 = sphi 0, %s112
    %s115 = sphi 0, %s114
    %s129 = sphi 0, %s115
    %s133 = sphi 0, %s133
    %s135 = sphi 0, %s133
    %s136 = sphi 0, %s135
    %s150 = sphi 0, %s136
    %s154 = sphi 0, %s154
    %s156 = sphi 0, %s154
    %s157 = sphi 0, %s156
    %s171 = sphi 0, %s157
    %s177 = sphi 0, %s179
    %s180 = sphi 0, %s177
    %s181 = sphi 0, %s180
    %s197 = sphi 0, %s181
  $region4: #{tpu_custom_call.1} parent=0 // loop_header_branch
    %18 = sbr.rel (%p16) target = $region8
  $region5: #{tpu_custom_call.1} parent=0 // loop_body
    %s20 = ssub.s32 %s15, 1
    %s21 = ssub.s32 %s15, 2
    %s22 = sadd.s32 %s15, 1
    %s23 = ssub.s32 %s15, %s22
    %p24 = scmp.eq.s32.totalorder %s23, 0
    %s26 = sadd.s32 %s25, 1
    %s27 = scalar_select %p24, %s25, %s26
    %p30 = pneg %p24
    %p31 = scmp.eq.s32.totalorder %s15, 1
    %p32 = por %p30, %p31
    %p33 = scmp.ne.s32.totalorder %s25, %s28
    %p34 = scmp.eq.s32.totalorder %s15, 0
    %p35 = por %p33, %p34
    %p36 = scmp.ne.s32.totalorder %s25, %s28
    %p37 = scmp.eq.s32.totalorder %s20, 1
    %p38 = por %p36, %p37
    %p39 = scmp.ne.s32.totalorder %s28, %s29
    %p40 = scmp.eq.s32.totalorder %s20, 0
    %p41 = por %p39, %p40
    %p42 = scmp.ne.s32.totalorder %s28, %s29
    %p43 = scmp.eq.s32.totalorder %s21, 1
    %p44 = por %p42, %p43
    %p46 = scmp.ne.s32.totalorder %s29, %s45
    %p47 = scmp.eq.s32.totalorder %s21, 0
    %p48 = por %p46, %p47
    %s50 = sadd.s32 %s49, 1
    %p53 = scmp.eq.s32.totalorder %s15, 1
    %p54 = scmp.ne.s32.totalorder %s49, %s51
    %p55 = scmp.eq.s32.totalorder %s15, 0
    %p56 = por %p54, %p55
    %p57 = scmp.ne.s32.totalorder %s49, %s51
    %p58 = scmp.eq.s32.totalorder %s20, 1
    %p59 = por %p57, %p58
    %p60 = scmp.ne.s32.totalorder %s51, %s52
    %p61 = scmp.eq.s32.totalorder %s20, 0
    %p62 = por %p60, %p61
    %p63 = scmp.ne.s32.totalorder %s51, %s52
    %p64 = scmp.eq.s32.totalorder %s21, 1
    %p65 = por %p63, %p64
    %p67 = scmp.ne.s32.totalorder %s52, %s66
    %p68 = scmp.eq.s32.totalorder %s21, 0
    %p69 = por %p67, %p68
    %s71 = sadd.s32 %s70, 1
    %p74 = scmp.eq.s32.totalorder %s15, 1
    %p75 = scmp.ne.s32.totalorder %s70, %s72
    %p76 = scmp.eq.s32.totalorder %s15, 0
    %p77 = por %p75, %p76
    %p78 = scmp.ne.s32.totalorder %s70, %s72
    %p79 = scmp.eq.s32.totalorder %s20, 1
    %p80 = por %p78, %p79
    %p81 = scmp.ne.s32.totalorder %s72, %s73
    %p82 = scmp.eq.s32.totalorder %s20, 0
    %p83 = por %p81, %p82
    %p84 = scmp.ne.s32.totalorder %s72, %s73
    %p85 = scmp.eq.s32.totalorder %s21, 1
    %p86 = por %p84, %p85
    %p88 = scmp.ne.s32.totalorder %s73, %s87
    %p89 = scmp.eq.s32.totalorder %s21, 0
    %p90 = por %p88, %p89
    %s92 = sadd.s32 %s91, 1
    %p95 = scmp.eq.s32.totalorder %s15, 1
    %p96 = scmp.ne.s32.totalorder %s91, %s93
    %p97 = scmp.eq.s32.totalorder %s15, 0
    %p98 = por %p96, %p97
    %p99 = scmp.ne.s32.totalorder %s91, %s93
    %p100 = scmp.eq.s32.totalorder %s20, 1
    %p101 = por %p99, %p100
    %p102 = scmp.ne.s32.totalorder %s93, %s94
    %p103 = scmp.eq.s32.totalorder %s20, 0
    %p104 = por %p102, %p103
    %p105 = scmp.ne.s32.totalorder %s93, %s94
    %p106 = scmp.eq.s32.totalorder %s21, 1
    %p107 = por %p105, %p106
    %p109 = scmp.ne.s32.totalorder %s94, %s108
    %p110 = scmp.eq.s32.totalorder %s21, 0
    %p111 = por %p109, %p110
    %s113 = sadd.s32 %s112, 1
    %p116 = scmp.eq.s32.totalorder %s15, 1
    %p117 = scmp.ne.s32.totalorder %s112, %s114
    %p118 = scmp.eq.s32.totalorder %s15, 0
    %p119 = por %p117, %p118
    %p120 = scmp.ne.s32.totalorder %s112, %s114
    %p121 = scmp.eq.s32.totalorder %s20, 1
    %p122 = por %p120, %p121
    %p123 = scmp.ne.s32.totalorder %s114, %s115
    %p124 = scmp.eq.s32.totalorder %s20, 0
    %p125 = por %p123, %p124
    %p126 = scmp.ne.s32.totalorder %s114, %s115
    %p127 = scmp.eq.s32.totalorder %s21, 1
    %p128 = por %p126, %p127
    %p130 = scmp.ne.s32.totalorder %s115, %s129
    %p131 = scmp.eq.s32.totalorder %s21, 0
    %p132 = por %p130, %p131
    %s134 = sadd.s32 %s133, 1
    %p137 = scmp.eq.s32.totalorder %s15, 1
    %p138 = scmp.ne.s32.totalorder %s133, %s135
    %p139 = scmp.eq.s32.totalorder %s15, 0
    %p140 = por %p138, %p139
    %p141 = scmp.ne.s32.totalorder %s133, %s135
    %p142 = scmp.eq.s32.totalorder %s20, 1
    %p143 = por %p141, %p142
    %p144 = scmp.ne.s32.totalorder %s135, %s136
    %p145 = scmp.eq.s32.totalorder %s20, 0
    %p146 = por %p144, %p145
    %p147 = scmp.ne.s32.totalorder %s135, %s136
    %p148 = scmp.eq.s32.totalorder %s21, 1
    %p149 = por %p147, %p148
    %p151 = scmp.ne.s32.totalorder %s136, %s150
    %p152 = scmp.eq.s32.totalorder %s21, 0
    %p153 = por %p151, %p152
    %s155 = sadd.s32 %s154, 1
    %p158 = scmp.eq.s32.totalorder %s15, 1
    %p159 = scmp.ne.s32.totalorder %s154, %s156
    %p160 = scmp.eq.s32.totalorder %s15, 0
    %p161 = por %p159, %p160
    %p162 = scmp.ne.s32.totalorder %s154, %s156
    %p163 = scmp.eq.s32.totalorder %s20, 1
    %p164 = por %p162, %p163
    %p165 = scmp.ne.s32.totalorder %s156, %s157
    %p166 = scmp.eq.s32.totalorder %s20, 0
    %p167 = por %p165, %p166
    %p168 = scmp.ne.s32.totalorder %s156, %s157
    %p169 = scmp.eq.s32.totalorder %s21, 1
    %p170 = por %p168, %p169
    %p172 = scmp.ne.s32.totalorder %s157, %s171
    %p173 = scmp.eq.s32.totalorder %s21, 0
    %p174 = por %p172, %p173
    %s175 = ssub.s32 %s15, %s22
    %p176 = scmp.eq.s32.totalorder %s175, 0
    %s178 = sadd.s32 %s177, 1
    %s179 = scalar_select %p176, %s177, %s178
    %p182 = pneg %p176
    %p183 = scmp.eq.s32.totalorder %s15, 1
    %p184 = por %p182, %p183
    %p185 = scmp.ne.s32.totalorder %s177, %s180
    %p186 = scmp.eq.s32.totalorder %s15, 0
    %p187 = por %p185, %p186
    %p188 = scmp.ne.s32.totalorder %s177, %s180
    %p189 = scmp.eq.s32.totalorder %s20, 1
    %p190 = por %p188, %p189
    %p191 = scmp.ne.s32.totalorder %s180, %s181
    %p192 = scmp.eq.s32.totalorder %s20, 0
    %p193 = por %p191, %p192
    %p194 = scmp.ne.s32.totalorder %s180, %s181
    %p195 = scmp.eq.s32.totalorder %s21, 1
    %p196 = por %p194, %p195
    %p198 = scmp.ne.s32.totalorder %s181, %s197
    %p199 = scmp.eq.s32.totalorder %s21, 0
    %p200 = por %p198, %p199
    %p201 = scmp.le.s32.totalorder 1, %s15
    %p202 = scmp.lt.s32.totalorder %s15, 3
    %p203 = pnand %p201, %p202
    %p204 = pneg %p203
    // Predicated region
    $region9: #{tpu_custom_call.1} parent=5 // pred_check
      _
    $region10: #{tpu_custom_call.1} parent=5 // pred_check_branch
      %206 = sbr.rel (%p203) target = $region12
    $region11: #{tpu_custom_call.1} parent=5 // pred_region
      %s207 = ssub.s32 %s15, 1
      // Predicated region
      $region13: #{tpu_custom_call.1} parent=11 // pred_check
        %p208 = pneg %p62
      $region14: #{tpu_custom_call.1} parent=11 // pred_check_branch
        %210 = sbr.rel (%p208) target = $region16
      $region15: #{tpu_custom_call.1} parent=11 // pred_region
        _
      $region16: #{tpu_custom_call.1} parent=11 // pred_fallthru
        _
      // Predicated region
      $region17: #{tpu_custom_call.1} parent=11 // pred_check
        %p211 = pneg %p83
      $region18: #{tpu_custom_call.1} parent=11 // pred_check_branch
        %213 = sbr.rel (%p211) target = $region20
      $region19: #{tpu_custom_call.1} parent=11 // pred_region
        _
      $region20: #{tpu_custom_call.1} parent=11 // pred_fallthru
        _
      // Predicated region
      $region21: #{tpu_custom_call.1} parent=11 // pred_check
        %p214 = pneg %p104
      $region22: #{tpu_custom_call.1} parent=11 // pred_check_branch
        %216 = sbr.rel (%p214) target = $region24
      $region23: #{tpu_custom_call.1} parent=11 // pred_region
        _
      $region24: #{tpu_custom_call.1} parent=11 // pred_fallthru
        _
      // Predicated region
      $region25: #{tpu_custom_call.1} parent=11 // pred_check
        %p217 = pneg %p125
      $region26: #{tpu_custom_call.1} parent=11 // pred_check_branch
        %219 = sbr.rel (%p217) target = $region28
      $region27: #{tpu_custom_call.1} parent=11 // pred_region
        _
      $region28: #{tpu_custom_call.1} parent=11 // pred_fallthru
        _
      // Predicated region
      $region29: #{tpu_custom_call.1} parent=11 // pred_check
        %p220 = pneg %p146
      $region30: #{tpu_custom_call.1} parent=11 // pred_check_branch
        %222 = sbr.rel (%p220) target = $region32
      $region31: #{tpu_custom_call.1} parent=11 // pred_region
        _
      $region32: #{tpu_custom_call.1} parent=11 // pred_fallthru
        _
      // Predicated region
      $region33: #{tpu_custom_call.1} parent=11 // pred_check
        %p223 = pneg %p167
      $region34: #{tpu_custom_call.1} parent=11 // pred_check_branch
        %225 = sbr.rel (%p223) target = $region36
      $region35: #{tpu_custom_call.1} parent=11 // pred_region
        _
      $region36: #{tpu_custom_call.1} parent=11 // pred_fallthru
        _
    $region12: #{tpu_custom_call.1} parent=5 // pred_fallthru
      _
    %p226 = scmp.lt.s32.totalorder %s15, 2
    // Predicated region
    $region37: #{tpu_custom_call.1} parent=5 // pred_check
      %p227 = pneg %p226
    $region38: #{tpu_custom_call.1} parent=5 // pred_check_branch
      %229 = sbr.rel (%p227) target = $region40
    $region39: #{tpu_custom_call.1} parent=5 // pred_region
      // Predicated region
      $region41: #{tpu_custom_call.1} parent=39 // pred_check
        %p230 = pneg %p35
      $region42: #{tpu_custom_call.1} parent=39 // pred_check_branch
        %232 = sbr.rel (%p230) target = $region44
      $region43: #{tpu_custom_call.1} parent=39 // pred_region
        %s233 = smul.u32 2, %s15
        %p234 = scmp.lt.s32.totalorder %s233, 3
        %s235 = scalar_select %p234, %s233, 3
        %s236 = smul.addr %s235, 4
        %s237 = scalar_lea.vmem %s0, %s236
        %s238 = smul.u32 2, %s15
      $region44: #{tpu_custom_call.1} parent=39 // pred_fallthru
        _
    $region40: #{tpu_custom_call.1} parent=5 // pred_fallthru
      _
    %p239 = scmp.le.s32.totalorder 1, %s15
    %p240 = scmp.lt.s32.totalorder %s15, 3
    %p241 = pnand %p239, %p240
    %p242 = pneg %p241
    // Predicated region
    $region45: #{tpu_custom_call.1} parent=5 // pred_check
      _
    $region46: #{tpu_custom_call.1} parent=5 // pred_check_branch
      %244 = sbr.rel (%p241) target = $region48
    $region47: #{tpu_custom_call.1} parent=5 // pred_region
      %s245 = ssub.s32 %s15, 1
      %s246 = smul.u32 2, %s20
      %p247 = scmp.lt.s32.totalorder %s246, 3
      %s248 = scalar_select %p247, %s246, 3
      %s249 = smul.addr %s248, 4
      %s250 = scalar_lea.vmem %s0, %s249
      %p251 = pneg %p41
      %p252 = pneg %p38
      %p253 = pneg %p62
      %p254 = pneg %p59
      %p255 = pneg %p83
      %p256 = pneg %p80
      %p257 = pneg %p104
      %p258 = pneg %p101
      %p259 = pneg %p125
      %p260 = pneg %p122
      %p261 = pneg %p146
      %p262 = pneg %p143
      %p263 = pneg %p167
      %p264 = pneg %p164
      %p265 = pneg %p193
      %p266 = pneg %p190
      %s267 = smul.u32 2, %s20
      %p268 = scmp.lt.s32.totalorder %s267, 3
      %s269 = scalar_select %p268, %s267, 3
      %s270 = smul.addr %s269, 4
      %s271 = scalar_lea.vmem %s7, %s270
      %s272 = smul.u32 2, %s20
      %p273 = scmp.lt.s32.totalorder %s272, 3
      %s274 = scalar_select %p273, %s272, 3
      %s275 = smul.addr %s274, 4
      %s276 = scalar_lea.vmem %s0, %s275
      %s277 = smul.u32 2, %s20
      %s278 = smul.u32 2, %s20
      %p279 = scmp.lt.s32.totalorder %s278, 3
      %s280 = scalar_select %p279, %s278, 3
      %s281 = smul.addr %s280, 4
      %s282 = scalar_lea.vmem %s7, %s281
      %s283 = smul.u32 2, %s20
      %v285 = vld [vmem:[%s276] sm:$0xf]
      %v286 = vld [vmem:[%s276 + $0x4] sm:$0xf]
      %v287 = vld [vmem:[%s1] sm:$0xf]
      %v288 = vld [vmem:[%s1 + $0x4] sm:$0xf]
      %v289 = vld [vmem:[%s1 + $0x8] sm:$0xf]
      %v290 = vld [vmem:[%s1 + $0xc] sm:$0xf]
      %v291 = vld [vmem:[%s2] sm:$0x1]
      %v293 = vperm.slane %v291, 0
      %v297 = vunpack.c.l.b16 %v285
      %v298 = vunpack.c.l.b16 %v286
      %v299 = vpack.c.b16 %v298, %v297
      %v304 = vunpack.c.l.b16 %v287
      %v305 = vunpack.c.l.b16 %v288
      %v306 = vunpack.c.l.b16 %v289
      %v307 = vunpack.c.l.b16 %v290
      %v308 = vpack.c.b16 %v305, %v304
      %v309 = vpack.c.b16 %v307, %v306
      %vm312 = vcmask 261120
      %v314 = vsel %vm312, %v299, 0
      %316 = vmatpush.bf16.msra.mxu0 0
      %317 = vmatpush.bf16.msra.mxu0 0
      %318 = vmatpush.bf16.msra.mxu0 0
      %319 = vmatpush.bf16.msra.mxu0 0
      %320 = vmatpush.bf16.msra.mxu0 0
      %321 = vmatpush.bf16.msra.mxu0 0
      %322 = vmatpush.bf16.msra.mxu0 %v309
      %323 = vmatpush.bf16.msra.mxu0 %v308
      %324 = vmatmul.bf16.gmra.mxu0 %v314
      %v325 = vpop.f32.mrf.mxu0
      %v326 = vadd.f32 %v293, %v325
      %v327 = vpop.f32.mrf.mxu0
      %v328 = vadd.f32 %v293, %v327
      %329 = vdwg.mxu0
      %v330 = vmax.f32 %v326, 0.0
      %v331 = vmax.f32 %v328, 0.0
      %v332 = vpack.c.bf16 %v331, %v330
      %v333 = vld [vmem:[%s3] sm:$0xf]
      %v334 = vld [vmem:[%s3 + $0x4] sm:$0xf]
      %v335 = vld [vmem:[%s3 + $0x8] sm:$0xf]
      %v336 = vld [vmem:[%s3 + $0xc] sm:$0xf]
      %v337 = vld [vmem:[%s3 + $0x10] sm:$0xf]
      %v338 = vld [vmem:[%s3 + $0x14] sm:$0xf]
      %v339 = vld [vmem:[%s3 + $0x18] sm:$0xf]
      %v340 = vld [vmem:[%s3 + $0x1c] sm:$0xf]
      %v341 = vld [vmem:[%s4] sm:$0x1]
      %v343 = vperm.slane %v341, 0
      %v353 = vunpack.c.l.b16 %v333
      %v354 = vunpack.c.l.b16 %v334
      %v355 = vunpack.c.l.b16 %v335
      %v356 = vunpack.c.l.b16 %v336
      %v357 = vunpack.c.l.b16 %v337
      %v358 = vunpack.c.l.b16 %v338
      %v359 = vunpack.c.l.b16 %v339
      %v360 = vunpack.c.l.b16 %v340
      %v361 = vpack.c.b16 %v354, %v353
      %v362 = vpack.c.b16 %v356, %v355
      %v363 = vpack.c.b16 %v358, %v357
      %v364 = vpack.c.b16 %v360, %v359
      %vm369 = vcmask 523264
      %v371 = vsel %vm369, %v332, 0
      %373 = vmatpush.bf16.msra.mxu0 0
      %374 = vmatpush.bf16.msra.mxu0 0
      %375 = vmatpush.bf16.msra.mxu0 0
      %376 = vmatpush.bf16.msra.mxu0 0
      %377 = vmatpush.bf16.msra.mxu0 %v364
      %378 = vmatpush.bf16.msra.mxu0 %v363
      %379 = vmatpush.bf16.msra.mxu0 %v362
      %380 = vmatpush.bf16.msra.mxu0 %v361
      %381 = vmatmul.bf16.gmra.mxu0 %v371
      %v382 = vpop.f32.mrf.mxu0
      %v383 = vadd.f32 %v343, %v382
      %v384 = vpop.f32.mrf.mxu0
      %v385 = vadd.f32 %v343, %v384
      %386 = vdwg.mxu0
      %v387 = vmax.f32 %v383, 0.0
      %v388 = vmax.f32 %v385, 0.0
      %v389 = vld [vmem:[%s5] sm:$0x1]
      %v390 = vunpack.c.l.bf16 %v389
      %v391 = vperm.slane %v390, 0
      %v392 = vmul.f32 %v387, %v391
      %v393 = vmul.f32 %v388, %v391
      %v394 = vsel %vm312, %v392, 0.0
      %395 = vadd.xlane.f32.xlu0 %v394
      %v396 = vpop.xlane.xlu0 %395
      %v397 = vsel %vm312, %v393, 0.0
      %398 = vadd.xlane.f32.xlu0 %v397
      %v399 = vpop.xlane.xlu0 %398
      %v400 = vld [vmem:[#allocation2] sm:$0x1]
      %v402 = vperm.slane %v400, 0
      %v404 = vadd.f32 %v396, %v402
      %v405 = vadd.f32 %v399, %v402
      %v406 = vxor.u32 %v404, 2147483648
      %v407 = vxor.u32 %v405, 2147483648
      %v408 = vmul.f32 %v406, 1.442695
      %v409 = vpow.pop %v408
      %v410 = vmul.f32 %v407, 1.442695
      %v411 = vpow.pop %v410
      %v412 = vadd.f32 %v409, 1.0
      %v413 = vadd.f32 %v411, 1.0
      %v414 = vrcp.pop %v412
      %v415 = vmul.f32 %v412, %v414
      %v416 = vsub.f32 1.0, %v415
      %v417 = vmul.f32 %v414, %v416
      %v418 = vadd.f32 %v414, %v417
      %vm419 = vweird.f32 %v412
      %vm420 = vweird.f32 %v414
      %vm421 = vmor %vm419, %vm420
      %v422 = vsel %vm421, %v414, %v418
      %v423 = vand.u32 2147483647, %v412
      %vm424 = vcmp.eq.f32.partialorder %v423, 8.507059e+37
      %v425 = vand.u32 %v412, 2147483648
      %v426 = vor.u32 1.1754944e-38, %v425
      %v427 = vsel %vm424, %v426, %v422
      %v428 = vmul.f32 1.0, %v427
      %v429 = vrcp.pop %v413
      %v430 = vmul.f32 %v413, %v429
      %v431 = vsub.f32 1.0, %v430
      %v432 = vmul.f32 %v429, %v431
      %v433 = vadd.f32 %v429, %v432
      %vm434 = vweird.f32 %v413
      %vm435 = vweird.f32 %v429
      %vm436 = vmor %vm434, %vm435
      %v437 = vsel %vm436, %v429, %v433
      %v438 = vand.u32 2147483647, %v413
      %vm439 = vcmp.eq.f32.partialorder %v438, 8.507059e+37
      %v440 = vand.u32 %v413, 2147483648
      %v441 = vor.u32 1.1754944e-38, %v440
      %v442 = vsel %vm439, %v441, %v437
      %v443 = vmul.f32 1.0, %v442
      %v444 = vpack.c.bf16 %v428, %v428
      %v445 = vpack.c.bf16 %v443, %v443
      %vm446 = vcmask 3072
      %447 = vst.msk [vmem:[%s282] sm:$0xf] %vm446, %v444
      %448 = vst.msk [vmem:[%s282 + $0x4] sm:$0xf] %vm446, %v445
      %s449 = smul.u32 2, %s20
      %p450 = scmp.lt.s32.totalorder %s449, 3
      %s451 = scalar_select %p450, %s449, 3
      %s452 = smul.addr %s451, 4
      %s453 = scalar_lea.vmem %s7, %s452
      // Predicated region
      $region49: #{tpu_custom_call.1} parent=47 // pred_check
        %p454 = pneg %p190
      $region50: #{tpu_custom_call.1} parent=47 // pred_check_branch
        %456 = sbr.rel (%p454) target = $region52
      $region51: #{tpu_custom_call.1} parent=47 // pred_region
        %s457 = smul.u32 2, %s20
      $region52: #{tpu_custom_call.1} parent=47 // pred_fallthru
        _
    $region48: #{tpu_custom_call.1} parent=5 // pred_fallthru
      _
    %p458 = scmp.le.s32.totalorder 2, %s15
    // Predicated region
    $region53: #{tpu_custom_call.1} parent=5 // pred_check
      %p459 = pneg %p458
    $region54: #{tpu_custom_call.1} parent=5 // pred_check_branch
      %461 = sbr.rel (%p459) target = $region56
    $region55: #{tpu_custom_call.1} parent=5 // pred_region
      %s462 = ssub.s32 %s15, 2
      // Predicated region
      $region57: #{tpu_custom_call.1} parent=55 // pred_check
        %p463 = pneg %p196
      $region58: #{tpu_custom_call.1} parent=55 // pred_check_branch
        %465 = sbr.rel (%p463) target = $region60
      $region59: #{tpu_custom_call.1} parent=55 // pred_region
        %s466 = smul.u32 2, %s21
        %p467 = scmp.lt.s32.totalorder %s466, 3
        %s468 = scalar_select %p467, %s466, 3
        %s469 = smul.addr %s468, 4
        %s470 = scalar_lea.vmem %s7, %s469
      $region60: #{tpu_custom_call.1} parent=55 // pred_fallthru
        _
    $region56: #{tpu_custom_call.1} parent=5 // pred_fallthru
      _
  $region6: #{tpu_custom_call.1} parent=0 // loop_footer
    %s19 = sadd.s32 1, %s15
  $region7: #{tpu_custom_call.1} parent=0 // loop_footer_branch
    %14 = sbr.rel target = $region3
  $region8: #{tpu_custom_call.1} parent=0 // loop_exit
    _

</llo_original>
